<compile_context>
chip_gen: v6e
topology: v6e:2x2x1
jax: 0.10.0
libtpu: 0.0.40
codegen_flags: <defaults>
</compile_context>

<pallas_src>
import numpy as np

import jax
import jax.numpy as jnp
from jax.experimental import pallas as pl
from jax.experimental.pallas import tpu as pltpu


def _pair(v):
    if isinstance(v, (tuple, list)):
        return int(v[0]), int(v[1])
    return int(v), int(v)


def _sublane_align(dtype):
    # Sublane packing: f32 -> 8, bf16/f16 -> 16, int8/fp8 -> 32.
    itemsize = int(jnp.dtype(dtype).itemsize)
    return {4: 8, 2: 16, 1: 32}.get(itemsize, 8)


def _vmem_budget():
    # Per-generation sizing: v7x has 64 MiB VMEM, v5e/v6e have 128 MiB.
    cap = 128 * 1024 * 1024
    try:
        cap = int(getattr(pltpu.get_tpu_info(), "vmem_capacity_bytes", cap))
    except Exception:
        pass
    vmem_limit = min((cap * 3) // 4, 96 * 1024 * 1024)   # v7x -> 48 MiB, v6e/v5e -> 96 MiB
    tile_budget = min(cap // 2, 64 * 1024 * 1024)        # v7x -> 32 MiB, v6e/v5e -> 64 MiB
    return tile_budget, vmem_limit


def _rows_matmul_kernel(x_ref, m_ref, o_ref):
    # (rows_tile, K) @ (K, Ncols) on the MXU with f32 accumulation.
    o_ref[...] = jnp.dot(x_ref[...], m_ref[...],
                         preferred_element_type=jnp.float32).astype(o_ref.dtype)


def _rows_matmul_inv_kernel(x_ref, m_ref, inv_ref, o_ref):
    # Same, plus a per-column f32 reciprocal (used when the mask must stay 0/1).
    s = jnp.dot(x_ref[...], m_ref[...], preferred_element_type=jnp.float32)
    o_ref[...] = (s * inv_ref[...]).astype(o_ref.dtype)


def _rows_matmul(x2, m, out_dtype, inv=None):
    """Row-tiled (R, K) @ (K, N) with a grid-invariant RHS (DMA'd once)."""
    r, k = int(x2.shape[0]), int(x2.shape[1])
    ncols = int(m.shape[1])
    in_b = int(jnp.dtype(x2.dtype).itemsize)
    out_b = int(jnp.dtype(out_dtype).itemsize)
    m_b = int(m.shape[0]) * ncols * int(jnp.dtype(m.dtype).itemsize)
    align = _sublane_align(x2.dtype)
    budget, vmem_limit = _vmem_budget()

    # Double-buffered input/output blocks; masks accounted at 2x (constant
    # index_map => DMA'd once, but the pipeline still allocates two buffers).
    per_row = 2 * k * in_b + 2 * ncols * out_b
    fixed = 2 * m_b + (2 * ncols * 4 if inv is not None else 0) + (1 << 20)
    cap = max((budget - fixed) // max(per_row, 1), align)
    # Keep >= ~8 grid steps when possible: 2-TC sharding + DMA/compute overlap.
    desired = max(pl.cdiv(r, 8), align)
    tile = int(min(cap, desired, r))
    if r >= align:
        tile = max((tile // align) * align, align)   # sublane-packed tile
    else:
        tile = r                                     # tiny R: one full (legal) block
    grid = (pl.cdiv(r, tile),)

    in_specs = [
        pl.BlockSpec((tile, k), lambda i: (i, 0)),
        pl.BlockSpec((int(m.shape[0]), ncols), lambda i: (0, 0)),  # constant mask
    ]
    operands = [x2, m]
    kernel = _rows_matmul_kernel
    if inv is not None:
        in_specs.append(pl.BlockSpec((1, ncols), lambda i: (0, 0)))  # constant inv
        operands.append(inv)
        kernel = _rows_matmul_inv_kernel

    return pl.pallas_call(
        kernel,
        out_shape=jax.ShapeDtypeStruct((r, ncols), out_dtype),
        grid_spec=pltpu.PrefetchScalarGridSpec(
            num_scalar_prefetch=0,
            grid=grid,
            in_specs=in_specs,
            out_specs=pl.BlockSpec((tile, ncols), lambda i: (i, 0)),
        ),
        compiler_params=pltpu.CompilerParams(
            dimension_semantics=("parallel",),
            vmem_limit_bytes=int(vmem_limit)),
    )(*operands)


def avg_pool2d(x, kernel_shape, stride=None, padding=0, ceil_mode=False,
               count_include_pad=True, divisor_override=None):
    """Pallas TPU equivalent of nn.AvgPool2d forward. x: (N, C, H, W)."""
    kh, kw = _pair(kernel_shape)
    sh, sw = _pair(stride) if stride is not None else (kh, kw)
    ph, pw = _pair(padding)
    if ceil_mode:
        # TODO(synk): ceil_mode=True output-size rule not implemented.
        raise NotImplementedError("ceil_mode=True is not supported")
    if ph > kh // 2 or pw > kw // 2:
        raise ValueError("pad should be at most half of kernel size")
    if divisor_override is not None and divisor_override == 0:
        raise ValueError("divisor_override must be non-zero")

    n, c, h, w = x.shape
    h_out = (h + 2 * ph - kh) // sh + 1
    w_out = (w + 2 * pw - kw) // sw + 1
    hw, ohw = h * w, h_out * w_out
    dtype = x.dtype
    itemsize = int(jnp.dtype(dtype).itemsize)

    # ---- grid-invariant 0/1 selection matrices against UNPADDED coords ------
    # Padded rows/cols simply contribute no 1s (padding folded in, no padded copy).
    ih, oh_ = np.arange(h), np.arange(h_out)
    sel_h = ((ih[:, None] >= oh_[None, :] * sh - ph) &
             (ih[:, None] < oh_[None, :] * sh - ph + kh)).astype(np.float64)   # (h, h_out)
    iw, ow_ = np.arange(w), np.arange(w_out)
    sel_w = ((iw[:, None] >= ow_[None, :] * sw - pw) &
             (iw[:, None] < ow_[None, :] * sw - pw + kw)).astype(np.float64)   # (w, w_out)

    # Per-window divisor, kept in separable form: cnt[o, p] = hdiv[o] * wdiv[p].
    hs, ws = oh_ * sh - ph, ow_ * sw - pw
    hc = (np.minimum(hs + kh, h) - np.maximum(hs, 0)).astype(np.float64)       # (h_out,)
    wc = (np.minimum(ws + kw, w) - np.maximum(ws, 0)).astype(np.float64)       # (w_out,)
    if divisor_override is not None:
        hdiv, wdiv = np.full(h_out, float(divisor_override)), np.ones(w_out)
    elif count_include_pad:
        hdiv, wdiv = np.full(h_out, float(kh * kw)), np.ones(w_out)
    else:
        hdiv, wdiv = hc, wc

    # ---- path selection: fused single matmul vs. separable two matmuls ------
    align = _sublane_align(dtype)
    budget, _ = _vmem_budget()
    fused_mask_bytes = hw * ohw * itemsize
    fused_fits = (
        fused_mask_bytes <= 4 * 1024 * 1024
        and 2 * fused_mask_bytes
            + (2 * hw * itemsize + 2 * ohw * max(itemsize, 4)) * align
            + (1 << 20) <= budget)

    if fused_fits:
        # Fused mask: m[i*w + j, o*w_out + p] = sel_h[i, o] * sel_w[j, p]
        m = (sel_h[:, None, :, None] * sel_w[None, :, None, :]).reshape(hw, ohw)
        x2 = x.reshape(n * c, hw)            # metadata-only (NCHW is contiguous)
        if jnp.dtype(dtype) == jnp.float32:
            # Fold 1/divisor into the f32 mask columns: no inv input, no epilogue mul.
            m = m / (hdiv[:, None] * wdiv[None, :]).reshape(1, ohw)
            out2 = _rows_matmul(x2, jnp.asarray(m, dtype=jnp.float32), dtype)
        else:
            # Keep the mask exact 0/1 in the narrow dtype; divide via f32 inv epilogue.
            inv = (1.0 / (hdiv[:, None] * wdiv[None, :])).reshape(1, ohw)
            out2 = _rows_matmul(x2, jnp.asarray(m, dtype=dtype), dtype,
                                inv=jnp.asarray(inv, dtype=jnp.float32))
        return out2.reshape(n, c, h_out, w_out)

    # Separable path: pool along W with (W x Wout), then along H with (H x Hout)
    # on the width-reduced f32 intermediate. Divisor factors folded per stage.
    mw = jnp.asarray(sel_w, dtype=dtype)                          # exact 0/1 in x.dtype
    inv_w = None
    if not np.allclose(wdiv, 1.0):
        inv_w = jnp.asarray((1.0 / wdiv).reshape(1, w_out), dtype=jnp.float32)
    mh = jnp.asarray(sel_h / hdiv[None, :], dtype=jnp.float32)    # (h, h_out), scaled

    x1 = x.reshape(n * c * h, w)
    y1 = _rows_matmul(x1, mw, jnp.float32, inv=inv_w)             # (N*C*H, Wout), f32
    y1t = (y1.reshape(n * c, h, w_out)
              .transpose(0, 2, 1)                                 # XLA op, reduced size
              .reshape(n * c * w_out, h))
    y2 = _rows_matmul(y1t, mh, dtype)                             # (N*C*Wout, Hout)
    out = (y2.reshape(n * c, w_out, h_out)
              .transpose(0, 2, 1)
              .reshape(n, c, h_out, w_out))
    # TODO(synk): the inter-stage transpose could be fused into the second
    # pallas_call's index_map to save one HBM round trip on the intermediate.
    return out


if __name__ == "__main__":
    key = jax.random.PRNGKey(0)

    # ---- primary test: fused path, count_include_pad=True -------------------
    x = jax.random.normal(key, (2, 4, 16, 16), dtype=jnp.float32)
    out = avg_pool2d(x, kernel_shape=3, stride=2, padding=1,
                     ceil_mode=False, count_include_pad=True,
                     divisor_override=None)
    out = jax.block_until_ready(out)

    win_sum = jax.lax.reduce_window(
        x, 0.0, jax.lax.add,
        window_dimensions=(1, 1, 3, 3), window_strides=(1, 1, 2, 2),
        padding=((0, 0), (0, 0), (1, 1), (1, 1)))
    ref = win_sum / 9.0
    assert out.shape == (2, 4, 8, 8), out.shape
    assert jnp.allclose(out, ref, atol=1e-5, rtol=1e-5)

    # ---- fused path, count_include_pad=False ---------------------------------
    out2 = avg_pool2d(x, kernel_shape=3, stride=2, padding=1,
                      ceil_mode=False, count_include_pad=False,
                      divisor_override=None)
    out2 = jax.block_until_ready(out2)
    cnt = jax.lax.reduce_window(
        jnp.ones_like(x), 0.0, jax.lax.add,
        window_dimensions=(1, 1, 3, 3), window_strides=(1, 1, 2, 2),
        padding=((0, 0), (0, 0), (1, 1), (1, 1)))
    assert jnp.allclose(out2, win_sum / cnt, atol=1e-5, rtol=1e-5)

    # ---- fused path, divisor_override ----------------------------------------
    out3 = avg_pool2d(x, kernel_shape=3, stride=2, padding=1,
                      ceil_mode=False, count_include_pad=True,
                      divisor_override=5)
    out3 = jax.block_until_ready(out3)
    assert jnp.allclose(out3, win_sum / 5.0, atol=1e-5, rtol=1e-5)

    # ---- separable two-matmul path (larger spatial extent) -------------------
    xl = jax.random.normal(jax.random.PRNGKey(1), (2, 4, 64, 64), dtype=jnp.float32)
    out4 = avg_pool2d(xl, kernel_shape=3, stride=2, padding=1,
                      ceil_mode=False, count_include_pad=False,
                      divisor_override=None)
    out4 = jax.block_until_ready(out4)
    win_sum_l = jax.lax.reduce_window(
        xl, 0.0, jax.lax.add,
        window_dimensions=(1, 1, 3, 3), window_strides=(1, 1, 2, 2),
        padding=((0, 0), (0, 0), (1, 1), (1, 1)))
    cnt_l = jax.lax.reduce_window(
        jnp.ones_like(xl), 0.0, jax.lax.add,
        window_dimensions=(1, 1, 3, 3), window_strides=(1, 1, 2, 2),
        padding=((0, 0), (0, 0), (1, 1), (1, 1)))
    assert out4.shape == (2, 4, 32, 32), out4.shape
    assert jnp.allclose(out4, win_sum_l / cnt_l, atol=1e-5, rtol=1e-5)

    print("KERNEL_OK")
</pallas_src>

<mosaic_0001>
module attributes {stable_mosaic.version = 11 : i64} {
  func.func @_rows_matmul_kernel(%arg0: i32, %arg1: memref<8x256xf32, #tpu.memory_space<vmem>>, %arg2: memref<256x64xf32, #tpu.memory_space<vmem>>, %arg3: memref<8x64xf32, #tpu.memory_space<vmem>>) attributes {dimension_semantics = [#tpu.dimension_semantics<parallel>], iteration_bounds = array<i64: 1>, scalar_prefetch = 0 : i64, scratch_operands = 0 : i64, tpu.core_type = #tpu.core_type<tc>, window_params = [{transform_indices = @transform_0, window_bounds = array<i64: 8, 256>}, {pipeline_mode = #tpu.pipeline_mode<synchronous>, transform_indices = @transform_1, window_bounds = array<i64: 256, 64>}, {transform_indices = @transform_2, window_bounds = array<i64: 8, 64>}]} {
    %c0 = arith.constant 0 : index
    %c0_0 = arith.constant 0 : index
    %0 = vector.load %arg1[%c0, %c0_0] : memref<8x256xf32, #tpu.memory_space<vmem>>, vector<8x256xf32>
    %c0_1 = arith.constant 0 : index
    %c0_2 = arith.constant 0 : index
    %1 = vector.load %arg2[%c0_1, %c0_2] : memref<256x64xf32, #tpu.memory_space<vmem>>, vector<256x64xf32>
    %cst = arith.constant dense<0.000000e+00> : vector<8x64xf32>
    %2 = tpu.matmul %0, %1, %cst {dimension_numbers = #tpu.dot_dimension_numbers<[1], [0], [0], [1], [0, 0, 1, 1], [], []>} : vector<8x256xf32>, vector<256x64xf32>, vector<8x64xf32> -> vector<8x64xf32>
    %c0_3 = arith.constant 0 : index
    %c0_4 = arith.constant 0 : index
    %3 = vector.load %arg3[%c0_3, %c0_4] : memref<8x64xf32, #tpu.memory_space<vmem>>, vector<8x64xf32>
    tpu.vector_store %arg3[%c0_3, %c0_4], %2 {strides = array<i32>} : memref<8x64xf32, #tpu.memory_space<vmem>>, vector<8x64xf32>,
    return
  }
  func.func @transform_0(%arg0: i32) -> (i32, i32) {
    %c0_i32 = arith.constant 0 : i32
    %c0_i32_0 = arith.constant 0 : i32
    return %arg0, %c0_i32 : i32, i32
  }
  func.func @transform_1(%arg0: i32) -> (i32, i32) {
    %c0_i32 = arith.constant 0 : i32
    %c0_i32_0 = arith.constant 0 : i32
    %c0_i32_1 = arith.constant 0 : i32
    return %c0_i32, %c0_i32_0 : i32, i32
  }
  func.func @transform_2(%arg0: i32) -> (i32, i32) {
    %c0_i32 = arith.constant 0 : i32
    %c0_i32_0 = arith.constant 0 : i32
    return %arg0, %c0_i32 : i32, i32
  }
}

</mosaic_0001>

<llo_original>
// kernel: tpu_custom_call.1
$region0: #{tpu_custom_call.1}
  #allocation0 [shape = 'u32[]', space=smem, size = 0x4, offset = 0x4, fixed_abs, tag = 'smem constant byte address 0x4 - core index']
  #allocation1 [shape = 'u32[144,128]{1,0:T(1,128)}', space=vmem, size = 0x12000, scoped, tag = 'internal scratch']
  %s0 = inlined_call_operand.vmem [shape: f32[8,256], index: 0, kind: input, shape index: {}]
  %s1 = inlined_call_operand.vmem [shape: f32[256,64], index: 1, kind: input, shape index: {}]
  %s2 = inlined_call_operand.hbm [shape: f32[8,64], index: 2, kind: output, shape index: {}]
  %s3 = sld [smem:[#allocation0]]
  $region18: #{tpu_custom_call.1} parent=0
    _
  %s5 = ssub.s32 1, %s3
  %s6 = scalar_select 0, %s5, %s3
  $region1: #{tpu_custom_call.1} parent=0
    #allocation2 [shape = 'u8[4096]{0}', space=vmem, size = 0x1000, scoped, tag = 'output window, operand 0, single buffered']
    #allocation3 [shape = 's32[1]{0}', space=sflag, size = 0x4, scoped, tag = 'scoped memory for tpu_custom_call.1']
    %7 = vsyncpa [#allocation3], 0
    // Predicated region
    $region2: #{tpu_custom_call.1} parent=1 // pred_check
      _
    $region3: #{tpu_custom_call.1} parent=1 // pred_check_branch
      %9 = sbr.rel (0) target = $region5
    $region4: #{tpu_custom_call.1} parent=1 // pred_region
      _
    $region5: #{tpu_custom_call.1} parent=1 // pred_fallthru
      _
    // Predicated region
    $region6: #{tpu_custom_call.1} parent=1 // pred_check
      _
    $region7: #{tpu_custom_call.1} parent=1 // pred_check_branch
      %11 = sbr.rel (0) target = $region9
    $region8: #{tpu_custom_call.1} parent=1 // pred_region
      _
    $region9: #{tpu_custom_call.1} parent=1 // pred_fallthru
      _
    %v12 = vld [vmem:[%s0] sm:$0xff]
    %v13 = vld [vmem:[%s0 + $0x8] sm:$0xff]
    %v14 = vld [vmem:[%s1] sm:$0xff]
    %v15 = vld [vmem:[%s1 + $0x8] sm:$0xff]
    %v16 = vld [vmem:[%s1 + $0x10] sm:$0xff]
    %v17 = vld [vmem:[%s1 + $0x18] sm:$0xff]
    %v18 = vld [vmem:[%s1 + $0x20] sm:$0xff]
    %v19 = vld [vmem:[%s1 + $0x28] sm:$0xff]
    %v20 = vld [vmem:[%s1 + $0x30] sm:$0xff]
    %v21 = vld [vmem:[%s1 + $0x38] sm:$0xff]
    %v22 = vld [vmem:[%s1 + $0x40] sm:$0xff]
    %v23 = vld [vmem:[%s1 + $0x48] sm:$0xff]
    %v24 = vld [vmem:[%s1 + $0x50] sm:$0xff]
    %v25 = vld [vmem:[%s1 + $0x58] sm:$0xff]
    %v26 = vld [vmem:[%s1 + $0x60] sm:$0xff]
    %v27 = vld [vmem:[%s1 + $0x68] sm:$0xff]
    %v28 = vld [vmem:[%s1 + $0x70] sm:$0xff]
    %v29 = vld [vmem:[%s1 + $0x78] sm:$0xff]
    %v30 = vld [vmem:[%s1 + $0x80] sm:$0xff]
    %v31 = vld [vmem:[%s1 + $0x88] sm:$0xff]
    %v32 = vld [vmem:[%s1 + $0x90] sm:$0xff]
    %v33 = vld [vmem:[%s1 + $0x98] sm:$0xff]
    %v34 = vld [vmem:[%s1 + $0xa0] sm:$0xff]
    %v35 = vld [vmem:[%s1 + $0xa8] sm:$0xff]
    %v36 = vld [vmem:[%s1 + $0xb0] sm:$0xff]
    %v37 = vld [vmem:[%s1 + $0xb8] sm:$0xff]
    %v38 = vld [vmem:[%s1 + $0xc0] sm:$0xff]
    %v39 = vld [vmem:[%s1 + $0xc8] sm:$0xff]
    %v40 = vld [vmem:[%s1 + $0xd0] sm:$0xff]
    %v41 = vld [vmem:[%s1 + $0xd8] sm:$0xff]
    %v42 = vld [vmem:[%s1 + $0xe0] sm:$0xff]
    %v43 = vld [vmem:[%s1 + $0xe8] sm:$0xff]
    %v44 = vld [vmem:[%s1 + $0xf0] sm:$0xff]
    %v45 = vld [vmem:[%s1 + $0xf8] sm:$0xff]
    %46 = vmatprep.subr.mxu0 0.0
    %47 = vmatpush1.msra.mxu0 %v29
    %48 = vmatprep.subr.mxu0 0.0
    %49 = vmatpush1.msra.mxu0 %v28
    %50 = vmatprep.subr.mxu0 0.0
    %51 = vmatpush1.msra.mxu0 %v27
    %52 = vmatprep.subr.mxu0 0.0
    %53 = vmatpush1.msra.mxu0 %v26
    %54 = vmatprep.subr.mxu0 0.0
    %55 = vmatpush1.msra.mxu0 %v25
    %56 = vmatprep.subr.mxu0 0.0
    %57 = vmatpush1.msra.mxu0 %v24
    %58 = vmatprep.subr.mxu0 0.0
    %59 = vmatpush1.msra.mxu0 %v23
    %60 = vmatprep.subr.mxu0 0.0
    %61 = vmatpush1.msra.mxu0 %v22
    %62 = vmatprep.subr.mxu0 0.0
    %63 = vmatpush1.msra.mxu0 %v21
    %64 = vmatprep.subr.mxu0 0.0
    %65 = vmatpush1.msra.mxu0 %v20
    %66 = vmatprep.subr.mxu0 0.0
    %67 = vmatpush1.msra.mxu0 %v19
    %68 = vmatprep.subr.mxu0 0.0
    %69 = vmatpush1.msra.mxu0 %v18
    %70 = vmatprep.subr.mxu0 0.0
    %71 = vmatpush1.msra.mxu0 %v17
    %72 = vmatprep.subr.mxu0 0.0
    %73 = vmatpush1.msra.mxu0 %v16
    %74 = vmatprep.subr.mxu0 0.0
    %75 = vmatpush1.msra.mxu0 %v15
    %76 = vmatprep.subr.mxu0 0.0
    %77 = vmatpush1.msra.mxu0 %v14
    %78 = vmatprep.subr.mxu0 0.0
    %79 = vmatpush2.msra.mxu0 %v45
    %80 = vmatprep.subr.mxu0 0.0
    %81 = vmatpush2.msra.mxu0 %v44
    %82 = vmatprep.subr.mxu0 0.0
    %83 = vmatpush2.msra.mxu0 %v43
    %84 = vmatprep.subr.mxu0 0.0
    %85 = vmatpush2.msra.mxu0 %v42
    %86 = vmatprep.subr.mxu0 0.0
    %87 = vmatpush2.msra.mxu0 %v41
    %88 = vmatprep.subr.mxu0 0.0
    %89 = vmatpush2.msra.mxu0 %v40
    %90 = vmatprep.subr.mxu0 0.0
    %91 = vmatpush2.msra.mxu0 %v39
    %92 = vmatprep.subr.mxu0 0.0
    %93 = vmatpush2.msra.mxu0 %v38
    %94 = vmatprep.subr.mxu0 0.0
    %95 = vmatpush2.msra.mxu0 %v37
    %96 = vmatprep.subr.mxu0 0.0
    %97 = vmatpush2.msra.mxu0 %v36
    %98 = vmatprep.subr.mxu0 0.0
    %99 = vmatpush2.msra.mxu0 %v35
    %100 = vmatprep.subr.mxu0 0.0
    %101 = vmatpush2.msra.mxu0 %v34
    %102 = vmatprep.subr.mxu0 0.0
    %103 = vmatpush2.msra.mxu0 %v33
    %104 = vmatprep.subr.mxu0 0.0
    %105 = vmatpush2.msra.mxu0 %v32
    %106 = vmatprep.subr.mxu0 0.0
    %107 = vmatpush2.msra.mxu0 %v31
    %108 = vmatprep.subr.mxu0 0.0
    %109 = vmatpush2.msra.mxu0 %v30
    %110 = vmatprep.mubr.f32.mxu0 %v13
    %111 = vmatmul.mubr.f32.gmra.mxu0 %v12
    %v112 = vpop.f32.mrf.mxu0
    %v113 = vadd.f32 0.0, %v112
    %v114 = vpop.f32.mrf.mxu0
    %115 = vdwg.mxu0
    %vm116 = vcmask 523264
    %117 = vst.msk [vmem:[#allocation2] sm:$0xff] %vm116, %v113
    // Predicated region
    $region10: #{tpu_custom_call.1} parent=1 // pred_check
      _
    $region11: #{tpu_custom_call.1} parent=1 // pred_check_branch
      %119 = sbr.rel (0) target = $region13
    $region12: #{tpu_custom_call.1} parent=1 // pred_region
      %s121 = ssub.s32 128, 128
      %122 = vsyncadd [#allocation3], %s121
      %s124 = sshll.u32 [#allocation2], 4
      %s125 = int_to_ptr.vmem [resolvable:$true] %s124
      %127 = dma.vmem_to_hbm [thread:$0]  %s125, 128, %s2, [#allocation3]
    $region13: #{tpu_custom_call.1} parent=1 // pred_fallthru
      _
    // Predicated region
    $region14: #{tpu_custom_call.1} parent=1 // pred_check
      _
    $region15: #{tpu_custom_call.1} parent=1 // pred_check_branch
      %129 = sbr.rel (0) target = $region17
    $region16: #{tpu_custom_call.1} parent=1 // pred_region
      %130 = dma.done [#allocation3], 128
    $region17: #{tpu_custom_call.1} parent=1 // pred_fallthru
      _
    %131 = vsyncpa [#allocation3], 1

</llo_original>
